<compile_context>
chip_gen: v5e
topology: v5e:2x2
jax: 0.10.0
libtpu: 0.0.40
codegen_flags: <defaults>
</compile_context>

<pallas_src>
import jax
import jax.numpy as jnp
from jax.experimental import pallas as pl
from jax.experimental.pallas import tpu as pltpu


_DEFAULT_ROW_TILE = 2048          # rows of 128 lanes -> 1 MiB f32 input block
_SMALL_INPUT_BYTES = 256 * 1024   # below this, plain JAX beats a kernel launch


def _cdiv(a, b):
    return -(-a // b)


def _round_up(a, b):
    return _cdiv(a, b) * b


def _tensorcores_per_chip():
    """2 on v7x-class chips (2 TC/chip), else 1. Heuristic on device_kind."""
    try:
        kind = jax.devices()[0].device_kind.lower()
    except Exception:
        return 1
    return 2 if "7" in kind else 1


def _se2_sq_sums_kernel(pred_ref, tgt_ref, out_ref, acc_all_ref, acc_th_ref):
    """Accumulate sum(diff^2) over all elements and over theta elements.

    pred_ref / tgt_ref : (row_tile, 128) blocks of the flattened [x,y,th,...]
                         pose stream (batch packed densely on sublanes+lanes).
    out_ref            : (2, 128) block per split; row 0 = per-lane sum of all
                         squared diffs, row 1 = per-lane sum of theta squared
                         diffs.  Written only on the last reduction step.
    acc_*_ref          : (row_tile, 128) f32 VMEM accumulators.
    """
    s = pl.program_id(0)          # split (core-parallel on 2-TC chips)
    t = pl.program_id(1)          # tile within split (reduction axis)

    @pl.when(t == 0)
    def _init():
        acc_all_ref[...] = jnp.zeros_like(acc_all_ref)
        acc_th_ref[...] = jnp.zeros_like(acc_th_ref)

    pred = pred_ref[...]
    tgt = tgt_ref[...]
    if pred.dtype != jnp.float32:
        pred = pred.astype(jnp.float32)
    if tgt.dtype != jnp.float32:
        tgt = tgt.astype(jnp.float32)

    diff = pred - tgt
    sq = diff * diff              # pure VPU: sub, mul

    # Pose column of each element: the flat stream is [x0,y0,th0,x1,...], so
    # column = flat_index mod 3 and theta elements are column == 2.  Only the
    # block's base offset mod 3 is needed -> no wide integer arithmetic.
    rows, lanes = sq.shape
    base_row = (s * pl.num_programs(1) + t) * rows
    base_mod3 = ((base_row % 3) * (lanes % 3)) % 3
    row_ids = jax.lax.broadcasted_iota(jnp.int32, sq.shape, 0)
    lane_ids = jax.lax.broadcasted_iota(jnp.int32, sq.shape, 1)
    cls = (row_ids * lanes + lane_ids + base_mod3) % 3
    is_theta = cls == 2

    acc_all_ref[...] += sq
    acc_th_ref[...] += jnp.where(is_theta, sq, 0.0)

    @pl.when(t == pl.num_programs(1) - 1)
    def _finalize():
        # One cross-sublane reduce per split; the cross-lane reduce happens in
        # the wrapper on the tiny (num_splits, 2, 128) output.
        out_ref[0:1, :] = jnp.sum(acc_all_ref[...], axis=0, keepdims=True)
        out_ref[1:2, :] = jnp.sum(acc_th_ref[...], axis=0, keepdims=True)


def _reference(pose_pred, pose_target, block_width, block_length):
    rg = ((block_width ** 2 + block_length ** 2) / 12.0) ** 0.5
    x_loss = jnp.mean((pose_pred[:, 0] - pose_target[:, 0]) ** 2)
    y_loss = jnp.mean((pose_pred[:, 1] - pose_target[:, 1]) ** 2)
    theta_loss = rg * jnp.mean((pose_pred[:, 2] - pose_target[:, 2]) ** 2)
    return x_loss + y_loss + theta_loss


def se2_pose_loss(pose_pred, pose_target, block_width, block_length, *,
                  num_splits=None, row_tile=None, force_pallas=False):
    """Pallas-backed SE(2) pose loss matching the PyTorch SE2PoseLoss module."""
    assert pose_pred.shape == pose_target.shape
    B, C = pose_pred.shape
    assert C == 3, "SE(2) pose must have 3 components [x, y, theta]"
    rg = float(((block_width ** 2 + block_length ** 2) / 12.0) ** 0.5)

    n_elems = 3 * B
    itemsize = jnp.dtype(pose_pred.dtype).itemsize
    if not force_pallas and n_elems * itemsize < _SMALL_INPUT_BYTES:
        # At the module's native size the loss is a handful of flops; plain
        # JAX (fused by XLA into neighbouring ops) beats any kernel launch.
        return _reference(pose_pred, pose_target, block_width, block_length)

    # ---- layout: flatten row-major (free view), pad only if needed --------
    n_rows_needed = _cdiv(n_elems, 128)
    if row_tile is None:
        row_tile = _DEFAULT_ROW_TILE
    # Multiple of 16 sublanes (valid for f32 and packed bf16 tiles).
    row_tile = max(16, min(_round_up(row_tile, 16), _round_up(n_rows_needed, 16)))

    tiles_total = _cdiv(n_rows_needed, row_tile)
    cores = _tensorcores_per_chip()
    if num_splits is None:
        num_splits = cores
    num_splits = max(1, min(int(num_splits), tiles_total))
    tiles_per_split = _cdiv(tiles_total, num_splits)
    n_rows = num_splits * tiles_per_split * row_tile
    padded_elems = n_rows * 128

    pred_flat = pose_pred.reshape(n_elems)
    tgt_flat = pose_target.reshape(n_elems)
    if padded_elems != n_elems:
        pad = padded_elems - n_elems
        # Zero padding contributes 0 to both squared-difference sums.
        pred_flat = jnp.pad(pred_flat, (0, pad))
        tgt_flat = jnp.pad(tgt_flat, (0, pad))
    pred2d = pred_flat.reshape(n_rows, 128)
    tgt2d = tgt_flat.reshape(n_rows, 128)

    in_spec = pl.BlockSpec((row_tile, 128),
                           lambda s, t: (s * tiles_per_split + t, 0))
    out_spec = pl.BlockSpec((None, 2, 128), lambda s, t: (s, 0, 0))

    if num_splits > 1 and num_splits <= cores:
        lead_sem = getattr(pltpu, "CORE_PARALLEL", pltpu.PARALLEL)
    elif num_splits > 1:
        lead_sem = pltpu.PARALLEL
    else:
        lead_sem = pltpu.ARBITRARY

    partials = pl.pallas_call(
        _se2_sq_sums_kernel,
        out_shape=jax.ShapeDtypeStruct((num_splits, 2, 128), jnp.float32),
        grid_spec=pltpu.PrefetchScalarGridSpec(
            num_scalar_prefetch=0,
            grid=(num_splits, tiles_per_split),
            in_specs=[in_spec, in_spec],
            out_specs=out_spec,
            scratch_shapes=[pltpu.VMEM((row_tile, 128), jnp.float32),
                            pltpu.VMEM((row_tile, 128), jnp.float32)],
        ),
        compiler_params=pltpu.CompilerParams(
            dimension_semantics=(lead_sem, pltpu.ARBITRARY)),
        cost_estimate=pl.CostEstimate(
            flops=10 * n_elems, transcendentals=0,
            bytes_accessed=2 * n_elems * itemsize),
    )(pred2d, tgt2d)

    # Final weighting / normalization on a few hundred floats in the wrapper
    # (XLA fuses it): loss = (sum_all + (rg - 1) * sum_theta) / B.
    sum_all = jnp.sum(partials[:, 0, :])
    sum_th = jnp.sum(partials[:, 1, :])
    return (sum_all + jnp.float32(rg - 1.0) * sum_th) * jnp.float32(1.0 / B)


if __name__ == "__main__":
    # Deterministic "parameters" of the module (object dimensions).
    block_width = 0.1
    block_length = 0.1

    key = jax.random.PRNGKey(0)
    k1, k2, k3, k4 = jax.random.split(key, 4)

    # 1) Module-native small shape; force the Pallas path so the kernel runs.
    B = 8
    pose_pred = jax.random.normal(k1, (B, 3), dtype=jnp.float32)
    pose_target = jax.random.normal(k2, (B, 3), dtype=jnp.float32)
    loss = jax.block_until_ready(
        se2_pose_loss(pose_pred, pose_target, block_width, block_length,
                      force_pallas=True))
    ref = _reference(pose_pred, pose_target, block_width, block_length)
    assert jnp.allclose(loss, ref, rtol=1e-5, atol=1e-5), (loss, ref)

    # 2) Multi-tile path: several reduction steps + a non-aligned padded tail,
    #    still small and fast.
    B2 = 1000
    p2 = jax.random.normal(k3, (B2, 3), dtype=jnp.float32)
    t2 = jax.random.normal(k4, (B2, 3), dtype=jnp.float32)
    loss2 = jax.block_until_ready(
        se2_pose_loss(p2, t2, block_width, block_length,
                      force_pallas=True, row_tile=16))
    ref2 = _reference(p2, t2, block_width, block_length)
    assert jnp.allclose(loss2, ref2, rtol=1e-5, atol=1e-5), (loss2, ref2)

    print("KERNEL_OK")
</pallas_src>

<mosaic_0001>
module attributes {stable_mosaic.version = 11 : i64} {
  func.func @_se2_sq_sums_kernel(%arg0: i32, %arg1: i32, %arg2: memref<16x128xf32, #tpu.memory_space<vmem>>, %arg3: memref<16x128xf32, #tpu.memory_space<vmem>>, %arg4: memref<1x2x128xf32, #tpu.memory_space<vmem>>, %arg5: memref<16x128xf32, #tpu.memory_space<vmem>>, %arg6: memref<16x128xf32, #tpu.memory_space<vmem>>) attributes {dimension_semantics = [#tpu.dimension_semantics<arbitrary>, #tpu.dimension_semantics<arbitrary>], iteration_bounds = array<i64: 1, 1>, scalar_prefetch = 0 : i64, scratch_operands = 2 : i64, tpu.core_type = #tpu.core_type<tc>, window_params = [{transform_indices = @transform_0, window_bounds = array<i64: 16, 128>}, {transform_indices = @transform_1, window_bounds = array<i64: 16, 128>}, {transform_indices = @transform_2, window_bounds = array<i64: 1, 2, 128>}]} {
    %c0_i32 = arith.constant 0 : i32
    %0 = arith.cmpi eq, %arg1, %c0_i32 : i32
    %1 = arith.extui %0 : i1 to i32
    %c0_i32_0 = arith.constant 0 : i32
    %2 = arith.cmpi ne, %1, %c0_i32_0 : i32
    scf.if %2 {
      %cst_32 = arith.constant 0.000000e+00 : f32
      %67 = vector.broadcast %cst_32 : f32 to vector<16x128xf32>
      %c0_33 = arith.constant 0 : index
      %c0_34 = arith.constant 0 : index
      %68 = vector.load %arg5[%c0_33, %c0_34] : memref<16x128xf32, #tpu.memory_space<vmem>>, vector<16x128xf32>
      tpu.vector_store %arg5[%c0_33, %c0_34], %67 {strides = array<i32>} : memref<16x128xf32, #tpu.memory_space<vmem>>, vector<16x128xf32>,
      %cst_35 = arith.constant 0.000000e+00 : f32
      %69 = vector.broadcast %cst_35 : f32 to vector<16x128xf32>
      %c0_36 = arith.constant 0 : index
      %c0_37 = arith.constant 0 : index
      %70 = vector.load %arg6[%c0_36, %c0_37] : memref<16x128xf32, #tpu.memory_space<vmem>>, vector<16x128xf32>
      tpu.vector_store %arg6[%c0_36, %c0_37], %69 {strides = array<i32>} : memref<16x128xf32, #tpu.memory_space<vmem>>, vector<16x128xf32>,
    } else {
    }
    %c0 = arith.constant 0 : index
    %c0_1 = arith.constant 0 : index
    %3 = vector.load %arg2[%c0, %c0_1] : memref<16x128xf32, #tpu.memory_space<vmem>>, vector<16x128xf32>
    %c0_2 = arith.constant 0 : index
    %c0_3 = arith.constant 0 : index
    %4 = vector.load %arg3[%c0_2, %c0_3] : memref<16x128xf32, #tpu.memory_space<vmem>>, vector<16x128xf32>
    %5 = arith.subf %3, %4 : vector<16x128xf32>
    %6 = arith.mulf %5, %5 : vector<16x128xf32>
    %c1_i32 = arith.constant 1 : i32
    %7 = arith.muli %arg0, %c1_i32 : i32
    %8 = arith.addi %7, %arg1 : i32
    %c16_i32 = arith.constant 16 : i32
    %9 = arith.muli %8, %c16_i32 : i32
    %c3_i32 = arith.constant 3 : i32
    %c0_i32_4 = arith.constant 0 : i32
    %10 = arith.cmpi eq, %c3_i32, %c0_i32_4 : i32
    %c1_i32_5 = arith.constant 1 : i32
    %11 = arith.select %10, %c1_i32_5, %c3_i32 : i32
    %12 = arith.remsi %9, %11 : i32
    %c0_i32_6 = arith.constant 0 : i32
    %13 = arith.cmpi ne, %12, %c0_i32_6 : i32
    %c0_i32_7 = arith.constant 0 : i32
    %14 = arith.cmpi slt, %12, %c0_i32_7 : i32
    %c0_i32_8 = arith.constant 0 : i32
    %15 = arith.cmpi slt, %11, %c0_i32_8 : i32
    %16 = arith.xori %14, %15 : i1
    %17 = arith.andi %16, %13 : i1
    %18 = arith.addi %12, %11 : i32
    %19 = arith.select %17, %18, %12 : i32
    %c2_i32 = arith.constant 2 : i32
    %20 = arith.muli %19, %c2_i32 : i32
    %c3_i32_9 = arith.constant 3 : i32
    %c0_i32_10 = arith.constant 0 : i32
    %21 = arith.cmpi eq, %c3_i32_9, %c0_i32_10 : i32
    %c1_i32_11 = arith.constant 1 : i32
    %22 = arith.select %21, %c1_i32_11, %c3_i32_9 : i32
    %23 = arith.remsi %20, %22 : i32
    %c0_i32_12 = arith.constant 0 : i32
    %24 = arith.cmpi ne, %23, %c0_i32_12 : i32
    %c0_i32_13 = arith.constant 0 : i32
    %25 = arith.cmpi slt, %23, %c0_i32_13 : i32
    %c0_i32_14 = arith.constant 0 : i32
    %26 = arith.cmpi slt, %22, %c0_i32_14 : i32
    %27 = arith.xori %25, %26 : i1
    %28 = arith.andi %27, %24 : i1
    %29 = arith.addi %23, %22 : i32
    %30 = arith.select %28, %29, %23 : i32
    %31 = tpu.iota {dimensions = array<i32: 0>} : vector<16x128xi32>
    %32 = tpu.iota {dimensions = array<i32: 1>} : vector<16x128xi32>
    %c128_i32 = arith.constant 128 : i32
    %33 = vector.broadcast %c128_i32 : i32 to vector<16x128xi32>
    %34 = arith.muli %31, %33 : vector<16x128xi32>
    %35 = arith.addi %34, %32 : vector<16x128xi32>
    %36 = vector.broadcast %30 : i32 to vector<16x128xi32>
    %37 = arith.addi %35, %36 : vector<16x128xi32>
    %c3_i32_15 = arith.constant 3 : i32
    %c0_i32_16 = arith.constant 0 : i32
    %38 = arith.cmpi eq, %c3_i32_15, %c0_i32_16 : i32
    %c1_i32_17 = arith.constant 1 : i32
    %39 = arith.select %38, %c1_i32_17, %c3_i32_15 : i32
    %40 = vector.broadcast %39 : i32 to vector<16x128xi32>
    %41 = arith.remsi %37, %40 : vector<16x128xi32>
    %c0_i32_18 = arith.constant 0 : i32
    %42 = vector.broadcast %c0_i32_18 : i32 to vector<16x128xi32>
    %43 = arith.cmpi ne, %41, %42 : vector<16x128xi32>
    %c0_i32_19 = arith.constant 0 : i32
    %44 = vector.broadcast %c0_i32_19 : i32 to vector<16x128xi32>
    %45 = arith.cmpi slt, %41, %44 : vector<16x128xi32>
    %c0_i32_20 = arith.constant 0 : i32
    %46 = arith.cmpi slt, %39, %c0_i32_20 : i32
    %47 = vector.broadcast %46 : i1 to vector<16x128xi1>
    %48 = vector.broadcast %47 : vector<16x128xi1> to vector<16x128xi1>
    %49 = arith.xori %45, %48 : vector<16x128xi1>
    %50 = arith.andi %49, %43 : vector<16x128xi1>
    %51 = vector.broadcast %39 : i32 to vector<16x128xi32>
    %52 = arith.addi %41, %51 : vector<16x128xi32>
    %53 = arith.select %50, %52, %41 : vector<16x128xi1>, vector<16x128xi32>
    %c2_i32_21 = arith.constant 2 : i32
    %54 = vector.broadcast %c2_i32_21 : i32 to vector<16x128xi32>
    %55 = arith.cmpi eq, %53, %54 : vector<16x128xi32>
    %c0_22 = arith.constant 0 : index
    %c0_23 = arith.constant 0 : index
    %56 = vector.load %arg5[%c0_22, %c0_23] : memref<16x128xf32, #tpu.memory_space<vmem>>, vector<16x128xf32>
    %57 = arith.addf %56, %6 : vector<16x128xf32>
    %c0_24 = arith.constant 0 : index
    %c0_25 = arith.constant 0 : index
    %58 = vector.load %arg5[%c0_24, %c0_25] : memref<16x128xf32, #tpu.memory_space<vmem>>, vector<16x128xf32>
    tpu.vector_store %arg5[%c0_24, %c0_25], %57 {strides = array<i32>} : memref<16x128xf32, #tpu.memory_space<vmem>>, vector<16x128xf32>,
    %c0_26 = arith.constant 0 : index
    %c0_27 = arith.constant 0 : index
    %59 = vector.load %arg6[%c0_26, %c0_27] : memref<16x128xf32, #tpu.memory_space<vmem>>, vector<16x128xf32>
    %cst = arith.constant 0.000000e+00 : f32
    %60 = vector.broadcast %cst : f32 to vector<16x128xf32>
    %61 = arith.select %55, %6, %60 : vector<16x128xi1>, vector<16x128xf32>
    %62 = arith.addf %59, %61 : vector<16x128xf32>
    %c0_28 = arith.constant 0 : index
    %c0_29 = arith.constant 0 : index
    %63 = vector.load %arg6[%c0_28, %c0_29] : memref<16x128xf32, #tpu.memory_space<vmem>>, vector<16x128xf32>
    tpu.vector_store %arg6[%c0_28, %c0_29], %62 {strides = array<i32>} : memref<16x128xf32, #tpu.memory_space<vmem>>, vector<16x128xf32>,
    %c0_i32_30 = arith.constant 0 : i32
    %64 = arith.cmpi eq, %arg1, %c0_i32_30 : i32
    %65 = arith.extui %64 : i1 to i32
    %c0_i32_31 = arith.constant 0 : i32
    %66 = arith.cmpi ne, %65, %c0_i32_31 : i32
    scf.if %66 {
      %c0_32 = arith.constant 0 : index
      %c0_33 = arith.constant 0 : index
      %67 = vector.load %arg5[%c0_32, %c0_33] : memref<16x128xf32, #tpu.memory_space<vmem>>, vector<16x128xf32>
      %cst_34 = arith.constant dense<0.000000e+00> : vector<128xf32>
      %68 = vector.multi_reduction <add>, %67, %cst_34 [0] : vector<16x128xf32> to vector<128xf32>
      %69 = vector.shape_cast %68 : vector<128xf32> to vector<1x128xf32>
      %c0_35 = arith.constant 0 : index
      %c0_36 = arith.constant 0 : index
      %c0_37 = arith.constant 0 : index
      %70 = vector.load %arg4[%c0_35, %c0_36, %c0_37] : memref<1x2x128xf32, #tpu.memory_space<vmem>>, vector<1x1x128xf32>
      %71 = vector.shape_cast %70 : vector<1x1x128xf32> to vector<1x128xf32>
      %72 = vector.shape_cast %69 : vector<1x128xf32> to vector<1x1x128xf32>
      tpu.vector_store %arg4[%c0_35, %c0_36, %c0_37], %72 {strides = array<i32>} : memref<1x2x128xf32, #tpu.memory_space<vmem>>, vector<1x1x128xf32>,
      %c0_38 = arith.constant 0 : index
      %c0_39 = arith.constant 0 : index
      %73 = vector.load %arg6[%c0_38, %c0_39] : memref<16x128xf32, #tpu.memory_space<vmem>>, vector<16x128xf32>
      %cst_40 = arith.constant dense<0.000000e+00> : vector<128xf32>
      %74 = vector.multi_reduction <add>, %73, %cst_40 [0] : vector<16x128xf32> to vector<128xf32>
      %75 = vector.shape_cast %74 : vector<128xf32> to vector<1x128xf32>
      %c0_41 = arith.constant 0 : index
      %c1 = arith.constant 1 : index
      %c0_42 = arith.constant 0 : index
      %76 = vector.load %arg4[%c0_41, %c1, %c0_42] : memref<1x2x128xf32, #tpu.memory_space<vmem>>, vector<1x1x128xf32>
      %77 = vector.shape_cast %76 : vector<1x1x128xf32> to vector<1x128xf32>
      %78 = vector.shape_cast %75 : vector<1x128xf32> to vector<1x1x128xf32>
      tpu.vector_store %arg4[%c0_41, %c1, %c0_42], %78 {strides = array<i32>} : memref<1x2x128xf32, #tpu.memory_space<vmem>>, vector<1x1x128xf32>,
    } else {
    }
    return
  }
  func.func @transform_0(%arg0: i32, %arg1: i32) -> (i32, i32) {
    %c1_i32 = arith.constant 1 : i32
    %0 = arith.muli %arg0, %c1_i32 : i32
    %1 = arith.addi %0, %arg1 : i32
    %c0_i32 = arith.constant 0 : i32
    %c0_i32_0 = arith.constant 0 : i32
    return %1, %c0_i32 : i32, i32
  }
  func.func @transform_1(%arg0: i32, %arg1: i32) -> (i32, i32) {
    %c1_i32 = arith.constant 1 : i32
    %0 = arith.muli %arg0, %c1_i32 : i32
    %1 = arith.addi %0, %arg1 : i32
    %c0_i32 = arith.constant 0 : i32
    %c0_i32_0 = arith.constant 0 : i32
    return %1, %c0_i32 : i32, i32
  }
  func.func @transform_2(%arg0: i32, %arg1: i32) -> (i32, i32, i32) {
    %c0_i32 = arith.constant 0 : i32
    %c0_i32_0 = arith.constant 0 : i32
    %c0_i32_1 = arith.constant 0 : i32
    return %arg0, %c0_i32, %c0_i32_0 : i32, i32, i32
  }
}

</mosaic_0001>

<llo_original>
// kernel: tpu_custom_call.1
$region0: #{tpu_custom_call.1}
  #allocation0 [shape = 'u32[]', space=smem, size = 0x4, offset = 0x4, fixed_abs, tag = 'smem constant byte address 0x4 - core index']
  #allocation1 [shape = 'u32[72,128]{1,0:T(1,128)}', space=vmem, size = 0x9000, scoped, tag = 'internal scratch']
  #allocation2 [shape = 'f32[16,128]{1,0:T(8,128)}', space=vmem, size = 0x2000, scoped, tag = 'scratch operand']
  #allocation3 [shape = 'f32[16,128]{1,0:T(8,128)}', space=vmem, size = 0x2000, scoped, tag = 'scratch operand']
  %s0 = inlined_call_operand.hbm [shape: f32[16,128], index: 0, kind: input, shape index: {}]
  %s1 = inlined_call_operand.hbm [shape: f32[16,128], index: 1, kind: input, shape index: {}]
  %s2 = inlined_call_operand.hbm [shape: f32[1,2,128], index: 2, kind: output, shape index: {}]
  %s3 = sld [smem:[#allocation0]]
  $region34: #{tpu_custom_call.1} parent=0
    _
  %s5 = ssub.s32 1, %s3
  %s6 = scalar_select 0, %s5, %s3
  $region1: #{tpu_custom_call.1} parent=0
    #allocation4 [shape = 'u8[8192]{0}', space=vmem, size = 0x2000, scoped, tag = 'input window, operand 0, single buffered']
    #allocation5 [shape = 's32[1]{0}', space=sflag, size = 0x4, scoped, tag = 'scoped memory for tpu_custom_call.1']
    #allocation6 [shape = 's32[1]{0}', space=sflag, size = 0x4, scoped, tag = 'scoped memory for tpu_custom_call.1']
    #allocation7 [shape = 'u8[8192]{0}', space=vmem, size = 0x2000, scoped, tag = 'input window, operand 1, single buffered']
    #allocation8 [shape = 's32[1]{0}', space=sflag, size = 0x4, scoped, tag = 'scoped memory for tpu_custom_call.1']
    #allocation9 [shape = 'u8[1024]{0}', space=vmem, size = 0x400, scoped, tag = 'output window, operand 0, single buffered']
    %7 = vsyncpa [#allocation5], 0
    %8 = vsyncpa [#allocation8], 0
    %9 = vsyncpa [#allocation6], 0
    // Predicated region
    $region2: #{tpu_custom_call.1} parent=1 // pred_check
      _
    $region3: #{tpu_custom_call.1} parent=1 // pred_check_branch
      %11 = sbr.rel (0) target = $region5
    $region4: #{tpu_custom_call.1} parent=1 // pred_region
      %s12 = sadd.s32 0, 0
      %s13 = smul.u32 2, %s12
      %15 = vsyncadd [#allocation5], 0
      %s16 = smul.addr %s13, 8
      %s17 = scalar_lea.hbm %s0, %s16
      %s18 = sshll.u32 %s17, 4
      %s19 = int_to_ptr.hbm [resolvable:$true] %s18
      %s20 = sshll.u32 [#allocation4], 4
      %s21 = int_to_ptr.vmem [resolvable:$true] %s20
      %26 = dma.hbm_to_vmem [thread:$0]  %s19, 256, %s21, [#allocation5], 128, 128, 8
    $region5: #{tpu_custom_call.1} parent=1 // pred_fallthru
      _
    // Predicated region
    $region6: #{tpu_custom_call.1} parent=1 // pred_check
      _
    $region7: #{tpu_custom_call.1} parent=1 // pred_check_branch
      %28 = sbr.rel (0) target = $region9
    $region8: #{tpu_custom_call.1} parent=1 // pred_region
      %s29 = sadd.s32 0, 0
      %s30 = smul.u32 2, %s29
      %32 = vsyncadd [#allocation8], 0
      %s33 = smul.addr %s30, 8
      %s34 = scalar_lea.hbm %s1, %s33
      %s35 = sshll.u32 %s34, 4
      %s36 = int_to_ptr.hbm [resolvable:$true] %s35
      %s37 = sshll.u32 [#allocation7], 4
      %s38 = int_to_ptr.vmem [resolvable:$true] %s37
      %43 = dma.hbm_to_vmem [thread:$0]  %s36, 256, %s38, [#allocation8], 128, 128, 8
    $region9: #{tpu_custom_call.1} parent=1 // pred_fallthru
      _
    // Predicated region
    $region10: #{tpu_custom_call.1} parent=1 // pred_check
      _
    $region11: #{tpu_custom_call.1} parent=1 // pred_check_branch
      %45 = sbr.rel (0) target = $region13
    $region12: #{tpu_custom_call.1} parent=1 // pred_region
      %47 = dma.done [#allocation5], 256
    $region13: #{tpu_custom_call.1} parent=1 // pred_fallthru
      _
    // Predicated region
    $region14: #{tpu_custom_call.1} parent=1 // pred_check
      _
    $region15: #{tpu_custom_call.1} parent=1 // pred_check_branch
      %49 = sbr.rel (0) target = $region17
    $region16: #{tpu_custom_call.1} parent=1 // pred_region
      %51 = dma.done [#allocation8], 256
    $region17: #{tpu_custom_call.1} parent=1 // pred_fallthru
      _
    %s52 = sadd.s32 0, 0
    %s53 = smul.u32 2, %s52
    %s54 = sadd.s32 0, 0
    %s55 = smul.u32 2, %s54
    %p56 = scmp.eq.s32.totalorder 0, 0
    // Predicated region
    $region18: #{tpu_custom_call.1} parent=1 // pred_check
      %p57 = pneg %p56
    $region19: #{tpu_custom_call.1} parent=1 // pred_check_branch
      %59 = sbr.rel (%p57) target = $region21
    $region20: #{tpu_custom_call.1} parent=1 // pred_region
      %60 = vst [vmem:[#allocation2] sm:$0xff] 0.0
      %61 = vst [vmem:[#allocation2 + $0x8] sm:$0xff] 0.0
      %62 = vst [vmem:[#allocation3] sm:$0xff] 0.0
      %63 = vst [vmem:[#allocation3 + $0x8] sm:$0xff] 0.0
    $region21: #{tpu_custom_call.1} parent=1 // pred_fallthru
      _
    %v64 = vld [vmem:[#allocation4] sm:$0xff]
    %v65 = vld [vmem:[#allocation4 + $0x8] sm:$0xff]
    %v66 = vld [vmem:[#allocation7] sm:$0xff]
    %v67 = vld [vmem:[#allocation7 + $0x8] sm:$0xff]
    %v68 = vsub.f32 %v64, %v66
    %v69 = vsub.f32 %v65, %v67
    %v70 = vmul.f32 %v68, %v68
    %v71 = vmul.f32 %v69, %v69
    %s72 = sadd.s32 0, 0
    %s73 = smul.u32 %s72, 16
    %p74 = scmp.lt.s32.totalorder %s73, 0
    %s75 = ssub.s32 0, %s73
    %s76 = scalar_select %p74, %s75, %s73
    %s77 = sdiv.u32.pop %s76, 3
    %s78 = srem.u32.pop %s76, 3
    %s79 = ssub.s32 0, %s78
    %s80 = scalar_select %p74, %s79, %s78
    %p81 = scmp.ne.s32.totalorder %s80, 0
    %p82 = scmp.lt.s32.totalorder %s80, 0
    %p83 = pnand %p82, %p81
    %p84 = pneg %p83
    %s85 = sadd.s32 %s80, 3
    %s86 = scalar_select %p84, %s85, %s80
    %s87 = smul.u32 %s86, 2
    %p88 = scmp.lt.s32.totalorder %s87, 0
    %s89 = ssub.s32 0, %s87
    %s90 = scalar_select %p88, %s89, %s87
    %s91 = sdiv.u32.pop %s90, 3
    %s92 = srem.u32.pop %s90, 3
    %s93 = ssub.s32 0, %s92
    %s94 = scalar_select %p88, %s93, %s92
    %p95 = scmp.ne.s32.totalorder %s94, 0
    %p96 = scmp.lt.s32.totalorder %s94, 0
    %p97 = pnand %p96, %p95
    %p98 = pneg %p97
    %s99 = sadd.s32 %s94, 3
    %s100 = scalar_select %p98, %s99, %s94
    %v101 = vlaneseq
    %v102 = vshrl.u32 %v101, 7
    %v103 = vadd.s32 %v102, 8
    %v104 = vlaneseq
    %v105 = vand.u32 %v104, 127
    %v106 = vmul.u32 %v102, 128
    %v107 = vmul.u32 %v103, 128
    %v108 = vadd.s32 %v106, %v105
    %v109 = vadd.s32 %v107, %v105
    %v110 = vstv %s100
    %v111 = vadd.s32 %v108, %v110
    %v112 = vadd.s32 %v109, %v110
    %vm113 = vcmp.lt.s32.totalorder %v111, 0
    %v114 = vsub.s32 0, %v111
    %v115 = vsel %vm113, %v114, %v111
    %v116 = vand.u32 %v115, 65535
    %v117 = vshrl.u32 %v115, 16
    %v119 = vmul.u32 %v116, 43691
    %v120 = vmul.u32 %v116, 43690
    %v121 = vmul.u32 %v117, 43691
    %v122 = vmul.u32 %v117, 43690
    %v123 = vshll.u32 %v120, 16
    %v124 = vshrl.u32 %v120, 16
    %v125 = vshll.u32 %v121, 16
    %v126 = vshrl.u32 %v121, 16
    %vm127 = vc.u32 %v119, %v123
    %v128 = vsel %vm127, 1, 0
    %v129 = vadd.s32 %v119, %v123
    %v130 = vadd.s32 %v122, %v128
    %vm131 = vc.u32 %v129, %v125
    %v132 = vsel %vm131, 1, 0
    %v133 = vadd.s32 %v129, %v125
    %v134 = vadd.s32 %v130, %v132
    %v135 = vadd.s32 %v134, %v124
    %v136 = vadd.s32 %v135, %v126
    %v137 = vshrl.u32 %v136, 1
    %v138 = vmul.u32 %v137, 3
    %v139 = vsub.s32 %v115, %v138
    %v140 = vsub.s32 0, %v139
    %v141 = vsel %vm113, %v140, %v139
    %vm142 = vcmp.lt.s32.totalorder %v112, 0
    %v143 = vsub.s32 0, %v112
    %v144 = vsel %vm142, %v143, %v112
    %v145 = vand.u32 %v144, 65535
    %v146 = vshrl.u32 %v144, 16
    %v148 = vmul.u32 %v145, 43691
    %v149 = vmul.u32 %v145, 43690
    %v150 = vmul.u32 %v146, 43691
    %v151 = vmul.u32 %v146, 43690
    %v152 = vshll.u32 %v149, 16
    %v153 = vshrl.u32 %v149, 16
    %v154 = vshll.u32 %v150, 16
    %v155 = vshrl.u32 %v150, 16
    %vm156 = vc.u32 %v148, %v152
    %v157 = vsel %vm156, 1, 0
    %v158 = vadd.s32 %v148, %v152
    %v159 = vadd.s32 %v151, %v157
    %vm160 = vc.u32 %v158, %v154
    %v161 = vsel %vm160, 1, 0
    %v162 = vadd.s32 %v158, %v154
    %v163 = vadd.s32 %v159, %v161
    %v164 = vadd.s32 %v163, %v153
    %v165 = vadd.s32 %v164, %v155
    %v166 = vshrl.u32 %v165, 1
    %v167 = vmul.u32 %v166, 3
    %v168 = vsub.s32 %v144, %v167
    %v169 = vsub.s32 0, %v168
    %v170 = vsel %vm142, %v169, %v168
    %vm171 = vcmp.ne.s32.totalorder %v141, 0
    %vm172 = vcmp.ne.s32.totalorder %v170, 0
    %vm173 = vcmp.lt.s32.totalorder %v141, 0
    %vm174 = vcmp.lt.s32.totalorder %v170, 0
    %vm175 = vmand %vm173, %vm171
    %vm176 = vmand %vm174, %vm172
    %v177 = vadd.s32 %v141, 3
    %v178 = vadd.s32 %v170, 3
    %v179 = vsel %vm175, %v177, %v141
    %v180 = vsel %vm176, %v178, %v170
    %vm181 = vcmp.eq.s32.totalorder %v179, 2
    %vm182 = vcmp.eq.s32.totalorder %v180, 2
    %v183 = vld [vmem:[#allocation2] sm:$0xff]
    %v184 = vld [vmem:[#allocation2 + $0x8] sm:$0xff]
    %v185 = vadd.f32 %v183, %v70
    %v186 = vadd.f32 %v184, %v71
    %187 = vst [vmem:[#allocation2] sm:$0xff] %v185
    %188 = vst [vmem:[#allocation2 + $0x8] sm:$0xff] %v186
    %v189 = vld [vmem:[#allocation3] sm:$0xff]
    %v190 = vld [vmem:[#allocation3 + $0x8] sm:$0xff]
    %v191 = vsel %vm181, %v70, 0.0
    %v192 = vsel %vm182, %v71, 0.0
    %v193 = vadd.f32 %v189, %v191
    %v194 = vadd.f32 %v190, %v192
    %195 = vst [vmem:[#allocation3] sm:$0xff] %v193
    %196 = vst [vmem:[#allocation3 + $0x8] sm:$0xff] %v194
    // Predicated region
    $region22: #{tpu_custom_call.1} parent=1 // pred_check
      %p197 = pneg %p56
    $region23: #{tpu_custom_call.1} parent=1 // pred_check_branch
      %199 = sbr.rel (%p197) target = $region25
    $region24: #{tpu_custom_call.1} parent=1 // pred_region
      %v200 = vld [vmem:[#allocation2] sm:$0xff]
      %v201 = vld [vmem:[#allocation2 + $0x8] sm:$0xff]
      %v202 = vadd.f32 %v200, %v201
      %v203 = vrot.slane %v202, 4
      %v204 = vadd.f32 %v202, %v203
      %v205 = vrot.slane %v204, 2
      %v206 = vadd.f32 %v204, %v205
      %v207 = vrot.slane %v206, 1
      %v208 = vadd.f32 %v206, %v207
      %209 = vst [vmem:[#allocation9] sm:$0x1] %v208
      %v210 = vld [vmem:[#allocation3] sm:$0xff]
      %v211 = vld [vmem:[#allocation3 + $0x8] sm:$0xff]
      %v212 = vadd.f32 %v210, %v211
      %v213 = vrot.slane %v212, 4
      %v214 = vadd.f32 %v212, %v213
      %v215 = vrot.slane %v214, 2
      %v216 = vadd.f32 %v214, %v215
      %v217 = vrot.slane %v216, 1
      %v218 = vadd.f32 %v216, %v217
      %219 = vst [vmem:[#allocation9 + $0x1] sm:$0x1] %v218
    $region25: #{tpu_custom_call.1} parent=1 // pred_fallthru
      _
    // Predicated region
    $region26: #{tpu_custom_call.1} parent=1 // pred_check
      _
    $region27: #{tpu_custom_call.1} parent=1 // pred_check_branch
      %221 = sbr.rel (0) target = $region29
    $region28: #{tpu_custom_call.1} parent=1 // pred_region
      %223 = vsyncadd [#allocation6], 0
      %s225 = sshll.u32 [#allocation9], 4
      %s226 = int_to_ptr.vmem [resolvable:$true] %s225
      %s227 = sshll.u32 %s2, 4
      %s228 = int_to_ptr.hbm [resolvable:$true] %s227
      %230 = dma.vmem_to_hbm [thread:$0]  %s226, 32, %s228, [#allocation6]
    $region29: #{tpu_custom_call.1} parent=1 // pred_fallthru
      _
    // Predicated region
    $region30: #{tpu_custom_call.1} parent=1 // pred_check
      _
    $region31: #{tpu_custom_call.1} parent=1 // pred_check_branch
      %232 = sbr.rel (0) target = $region33
    $region32: #{tpu_custom_call.1} parent=1 // pred_region
      %234 = dma.done [#allocation6], 32
    $region33: #{tpu_custom_call.1} parent=1 // pred_fallthru
      _
    %235 = vsyncpa [#allocation5], 1
    %236 = vsyncpa [#allocation8], 1
    %237 = vsyncpa [#allocation6], 1

</llo_original>
